<compile_context>
chip_gen: v6e
topology: v6e:2x2x1
jax: 0.10.0
libtpu: 0.0.40
codegen_flags: <defaults>
</compile_context>

<pallas_src>
import math
from functools import partial

import jax
import jax.numpy as jnp
import numpy as np
from jax.experimental import pallas as pl
from jax.experimental.pallas import tpu as pltpu


def _round_up(x, m):
    return (x + m - 1) // m * m


def make_sinusoidal_table(T, d_model):
    """Matches TimeEmbedding.__init__: interleaved [sin, cos] per frequency."""
    assert d_model % 2 == 0
    freqs = np.exp(-(np.arange(0, d_model, 2, dtype=np.float64) / d_model)
                   * math.log(10000.0))                       # (d_model/2,)
    pos = np.arange(T, dtype=np.float64)[:, None]             # (T, 1)
    ang = pos * freqs[None, :]                                # (T, d_model/2)
    tab = np.stack([np.sin(ang), np.cos(ang)], axis=-1)       # (T, d_model/2, 2)
    return jnp.asarray(tab.reshape(T, d_model), jnp.float32)


# ---------------------------- Pallas kernel ---------------------------------
def time_embedding_kernel(emb_ref, w1_ref, b1_ref, w2_ref, b2_ref, o_ref):
    # emb_ref: (TB, d_model)   gathered sinusoidal embeddings (one batch tile)
    # w1_ref:  (d_model, dim)  Linear1 weight, transposed (resident in VMEM)
    # b1_ref:  (1, dim)        Linear1 bias
    # w2_ref:  (dim, dim)      Linear2 weight, transposed (resident in VMEM)
    # b2_ref:  (1, dim)        Linear2 bias
    # o_ref:   (TB, dim)
    h = jnp.dot(emb_ref[...], w1_ref[...],
                preferred_element_type=jnp.float32) + b1_ref[...]
    h = h * jax.nn.sigmoid(h)                      # Swish (sigmoid -> EUP slot)
    o_ref[...] = (jnp.dot(h, w2_ref[...], preferred_element_type=jnp.float32)
                  + b2_ref[...]).astype(o_ref.dtype)


# ------------------------------- wrapper -------------------------------------
@partial(jax.jit, static_argnames=("row_tile",))
def time_embedding_forward(t, params, *, row_tile=512):
    """t: (B,) int32 timestep indices. Returns (B, dim) f32."""
    table = params["emb_table"]                    # (T, d_model)
    d_model = table.shape[1]
    dim = params["w1"].shape[0]
    B = t.shape[0]

    # nn.Embedding lookup: tiny data-dependent gather, fused by XLA.
    emb = table[t]                                 # (B, d_model)

    # Pad batch to a multiple of 8 (sublane) and pick a batch tile.
    B8 = _round_up(B, 8)
    TB = min(B8, _round_up(row_tile, 8))
    B_pad = _round_up(B8, TB)
    if B_pad != B:
        emb = jnp.pad(emb, ((0, B_pad - B), (0, 0)))

    w1_t = params["w1"].T                          # (d_model, dim)
    w2_t = params["w2"].T                          # (dim, dim)
    b1 = params["b1"].reshape(1, dim)
    b2 = params["b2"].reshape(1, dim)

    # NOTE: for large `dim` on v6e/v7x one could cast the matmul operands to
    # bf16 (keeping preferred_element_type=f32) to double MXU throughput; at
    # these sizes f32 is kept for exactness.
    cost = pl.CostEstimate(
        flops=2 * B_pad * (d_model * dim + dim * dim),
        transcendentals=B_pad * dim,
        bytes_accessed=4 * (B_pad * d_model + d_model * dim + dim * dim
                            + 2 * dim + B_pad * dim),
    )

    out = pl.pallas_call(
        time_embedding_kernel,
        out_shape=jax.ShapeDtypeStruct((B_pad, dim), jnp.float32),
        grid=(B_pad // TB,),
        in_specs=[
            pl.BlockSpec((TB, d_model), lambda i: (i, 0)),   # embedding rows
            pl.BlockSpec((d_model, dim), lambda i: (0, 0)),  # W1^T (resident)
            pl.BlockSpec((1, dim), lambda i: (0, 0)),        # b1
            pl.BlockSpec((dim, dim), lambda i: (0, 0)),      # W2^T (resident)
            pl.BlockSpec((1, dim), lambda i: (0, 0)),        # b2
        ],
        out_specs=pl.BlockSpec((TB, dim), lambda i: (i, 0)),
        compiler_params=pltpu.CompilerParams(
            dimension_semantics=("parallel",)),
        cost_estimate=cost,
    )(emb, w1_t, b1, w2_t, b2)

    return out[:B]


# --------------------------- pure-JAX reference -------------------------------
def _reference(t, params):
    emb = params["emb_table"][t]                              # (B, d_model)
    h = emb @ params["w1"].T + params["b1"]
    h = h * jax.nn.sigmoid(h)                                 # Swish
    return h @ params["w2"].T + params["b2"]


# --------------------------------- main ---------------------------------------
if __name__ == "__main__":
    T, d_model, dim, B = 1000, 128, 128, 8

    key = jax.random.PRNGKey(0)
    k1, k2, k3, k4, k5 = jax.random.split(key, 5)

    # Xavier-like scales; the module zero-inits biases, but small random biases
    # are used here so the bias-add path is actually exercised by the test.
    params = {
        "emb_table": make_sinusoidal_table(T, d_model),
        "w1": (math.sqrt(2.0 / (d_model + dim))
               * jax.random.normal(k1, (dim, d_model))).astype(jnp.float32),
        "b1": (0.01 * jax.random.normal(k2, (dim,))).astype(jnp.float32),
        "w2": (math.sqrt(1.0 / dim)
               * jax.random.normal(k3, (dim, dim))).astype(jnp.float32),
        "b2": (0.01 * jax.random.normal(k4, (dim,))).astype(jnp.float32),
    }
    t = jax.random.randint(k5, (B,), 0, T, dtype=jnp.int32)

    out = time_embedding_forward(t, params)
    out = jax.block_until_ready(out)

    ref = _reference(t, params)
    np.testing.assert_allclose(np.asarray(out), np.asarray(ref),
                               atol=1e-4, rtol=1e-4)

    print("KERNEL_OK")
</pallas_src>

<mosaic_0001>
module attributes {stable_mosaic.version = 11 : i64} {
  func.func @time_embedding_kernel(%arg0: i32, %arg1: memref<8x128xf32, #tpu.memory_space<vmem>>, %arg2: memref<128x128xf32, #tpu.memory_space<vmem>>, %arg3: memref<1x128xf32, #tpu.memory_space<vmem>>, %arg4: memref<128x128xf32, #tpu.memory_space<vmem>>, %arg5: memref<1x128xf32, #tpu.memory_space<vmem>>, %arg6: memref<8x128xf32, #tpu.memory_space<vmem>>) attributes {dimension_semantics = [#tpu.dimension_semantics<parallel>], iteration_bounds = array<i64: 1>, scalar_prefetch = 0 : i64, scratch_operands = 0 : i64, tpu.core_type = #tpu.core_type<tc>, window_params = [{transform_indices = @transform_0, window_bounds = array<i64: 8, 128>}, {pipeline_mode = #tpu.pipeline_mode<synchronous>, transform_indices = @transform_1, window_bounds = array<i64: 128, 128>}, {pipeline_mode = #tpu.pipeline_mode<synchronous>, transform_indices = @transform_2, window_bounds = array<i64: 1, 128>}, {pipeline_mode = #tpu.pipeline_mode<synchronous>, transform_indices = @transform_3, window_bounds = array<i64: 128, 128>}, {pipeline_mode = #tpu.pipeline_mode<synchronous>, transform_indices = @transform_4, window_bounds = array<i64: 1, 128>}, {transform_indices = @transform_5, window_bounds = array<i64: 8, 128>}]} {
    %c0 = arith.constant 0 : index
    %c0_0 = arith.constant 0 : index
    %0 = vector.load %arg1[%c0, %c0_0] : memref<8x128xf32, #tpu.memory_space<vmem>>, vector<8x128xf32>
    %c0_1 = arith.constant 0 : index
    %c0_2 = arith.constant 0 : index
    %1 = vector.load %arg2[%c0_1, %c0_2] : memref<128x128xf32, #tpu.memory_space<vmem>>, vector<128x128xf32>
    %cst = arith.constant dense<0.000000e+00> : vector<8x128xf32>
    %2 = tpu.matmul %0, %1, %cst {dimension_numbers = #tpu.dot_dimension_numbers<[1], [0], [0], [1], [0, 0, 1, 1], [], []>} : vector<8x128xf32>, vector<128x128xf32>, vector<8x128xf32> -> vector<8x128xf32>
    %c0_3 = arith.constant 0 : index
    %c0_4 = arith.constant 0 : index
    %3 = vector.load %arg3[%c0_3, %c0_4] : memref<1x128xf32, #tpu.memory_space<vmem>>, vector<1x128xf32>
    %4 = vector.broadcast %3 : vector<1x128xf32> to vector<8x128xf32>
    %5 = arith.addf %2, %4 : vector<8x128xf32>
    %6 = arith.negf %5 : vector<8x128xf32>
    %7 = math.exp %6 : vector<8x128xf32>
    %cst_5 = arith.constant 1.000000e+00 : f32
    %8 = vector.broadcast %cst_5 : f32 to vector<8x128xf32>
    %9 = arith.addf %8, %7 : vector<8x128xf32>
    %10 = arith.divf %8, %9 : vector<8x128xf32>
    %11 = arith.mulf %5, %10 : vector<8x128xf32>
    %c0_6 = arith.constant 0 : index
    %c0_7 = arith.constant 0 : index
    %12 = vector.load %arg4[%c0_6, %c0_7] : memref<128x128xf32, #tpu.memory_space<vmem>>, vector<128x128xf32>
    %cst_8 = arith.constant dense<0.000000e+00> : vector<8x128xf32>
    %13 = tpu.matmul %11, %12, %cst_8 {dimension_numbers = #tpu.dot_dimension_numbers<[1], [0], [0], [1], [0, 0, 1, 1], [], []>} : vector<8x128xf32>, vector<128x128xf32>, vector<8x128xf32> -> vector<8x128xf32>
    %c0_9 = arith.constant 0 : index
    %c0_10 = arith.constant 0 : index
    %14 = vector.load %arg5[%c0_9, %c0_10] : memref<1x128xf32, #tpu.memory_space<vmem>>, vector<1x128xf32>
    %15 = vector.broadcast %14 : vector<1x128xf32> to vector<8x128xf32>
    %16 = arith.addf %13, %15 : vector<8x128xf32>
    %c0_11 = arith.constant 0 : index
    %c0_12 = arith.constant 0 : index
    %17 = vector.load %arg6[%c0_11, %c0_12] : memref<8x128xf32, #tpu.memory_space<vmem>>, vector<8x128xf32>
    tpu.vector_store %arg6[%c0_11, %c0_12], %16 {strides = array<i32>} : memref<8x128xf32, #tpu.memory_space<vmem>>, vector<8x128xf32>,
    return
  }
  func.func @transform_0(%arg0: i32) -> (i32, i32) {
    %c0_i32 = arith.constant 0 : i32
    %c0_i32_0 = arith.constant 0 : i32
    return %arg0, %c0_i32 : i32, i32
  }
  func.func @transform_1(%arg0: i32) -> (i32, i32) {
    %c0_i32 = arith.constant 0 : i32
    %c0_i32_0 = arith.constant 0 : i32
    %c0_i32_1 = arith.constant 0 : i32
    return %c0_i32, %c0_i32_0 : i32, i32
  }
  func.func @transform_2(%arg0: i32) -> (i32, i32) {
    %c0_i32 = arith.constant 0 : i32
    %c0_i32_0 = arith.constant 0 : i32
    %c0_i32_1 = arith.constant 0 : i32
    return %c0_i32, %c0_i32_0 : i32, i32
  }
  func.func @transform_3(%arg0: i32) -> (i32, i32) {
    %c0_i32 = arith.constant 0 : i32
    %c0_i32_0 = arith.constant 0 : i32
    %c0_i32_1 = arith.constant 0 : i32
    return %c0_i32, %c0_i32_0 : i32, i32
  }
  func.func @transform_4(%arg0: i32) -> (i32, i32) {
    %c0_i32 = arith.constant 0 : i32
    %c0_i32_0 = arith.constant 0 : i32
    %c0_i32_1 = arith.constant 0 : i32
    return %c0_i32, %c0_i32_0 : i32, i32
  }
  func.func @transform_5(%arg0: i32) -> (i32, i32) {
    %c0_i32 = arith.constant 0 : i32
    %c0_i32_0 = arith.constant 0 : i32
    return %arg0, %c0_i32 : i32, i32
  }
}

</mosaic_0001>

<llo_original>
// kernel: time_embedding_forward.1
$region0: #{time_embedding_forward.1}
  #allocation0 [shape = 'u32[]', space=smem, size = 0x4, offset = 0x4, fixed_abs, tag = 'smem constant byte address 0x4 - core index']
  #allocation1 [shape = 'u32[144,128]{1,0:T(1,128)}', space=vmem, size = 0x12000, scoped, tag = 'internal scratch']
  %s0 = inlined_call_operand.vmem [shape: f32[8,128], index: 0, kind: input, shape index: {}]
  %s1 = inlined_call_operand.vmem [shape: f32[128,128], index: 1, kind: input, shape index: {}]
  %s2 = inlined_call_operand.vmem [shape: f32[1,128], index: 2, kind: input, shape index: {}]
  %s3 = inlined_call_operand.vmem [shape: f32[128,128], index: 3, kind: input, shape index: {}]
  %s4 = inlined_call_operand.vmem [shape: f32[1,128], index: 4, kind: input, shape index: {}]
  %s5 = inlined_call_operand.hbm [shape: f32[8,128], index: 5, kind: output, shape index: {}]
  %s6 = sld [smem:[#allocation0]]
  $region30: #{time_embedding_forward.1} parent=0
    _
  %s8 = ssub.s32 1, %s6
  %s9 = scalar_select 0, %s8, %s6
  $region1: #{time_embedding_forward.1} parent=0
    #allocation2 [shape = 'u8[4096]{0}', space=vmem, size = 0x1000, scoped, tag = 'output window, operand 0, single buffered']
    #allocation3 [shape = 's32[1]{0}', space=sflag, size = 0x4, scoped, tag = 'scoped memory for time_embedding_forward.1']
    %10 = vsyncpa [#allocation3], 0
    // Predicated region
    $region2: #{time_embedding_forward.1} parent=1 // pred_check
      _
    $region3: #{time_embedding_forward.1} parent=1 // pred_check_branch
      %12 = sbr.rel (0) target = $region5
    $region4: #{time_embedding_forward.1} parent=1 // pred_region
      _
    $region5: #{time_embedding_forward.1} parent=1 // pred_fallthru
      _
    // Predicated region
    $region6: #{time_embedding_forward.1} parent=1 // pred_check
      _
    $region7: #{time_embedding_forward.1} parent=1 // pred_check_branch
      %14 = sbr.rel (0) target = $region9
    $region8: #{time_embedding_forward.1} parent=1 // pred_region
      _
    $region9: #{time_embedding_forward.1} parent=1 // pred_fallthru
      _
    // Predicated region
    $region10: #{time_embedding_forward.1} parent=1 // pred_check
      _
    $region11: #{time_embedding_forward.1} parent=1 // pred_check_branch
      %16 = sbr.rel (0) target = $region13
    $region12: #{time_embedding_forward.1} parent=1 // pred_region
      _
    $region13: #{time_embedding_forward.1} parent=1 // pred_fallthru
      _
    // Predicated region
    $region14: #{time_embedding_forward.1} parent=1 // pred_check
      _
    $region15: #{time_embedding_forward.1} parent=1 // pred_check_branch
      %18 = sbr.rel (0) target = $region17
    $region16: #{time_embedding_forward.1} parent=1 // pred_region
      _
    $region17: #{time_embedding_forward.1} parent=1 // pred_fallthru
      _
    // Predicated region
    $region18: #{time_embedding_forward.1} parent=1 // pred_check
      _
    $region19: #{time_embedding_forward.1} parent=1 // pred_check_branch
      %20 = sbr.rel (0) target = $region21
    $region20: #{time_embedding_forward.1} parent=1 // pred_region
      _
    $region21: #{time_embedding_forward.1} parent=1 // pred_fallthru
      _
    %v21 = vld [vmem:[%s0] sm:$0xff]
    %v22 = vld [vmem:[%s1] sm:$0xff]
    %v23 = vld [vmem:[%s1 + $0x8] sm:$0xff]
    %v24 = vld [vmem:[%s1 + $0x10] sm:$0xff]
    %v25 = vld [vmem:[%s1 + $0x18] sm:$0xff]
    %v26 = vld [vmem:[%s1 + $0x20] sm:$0xff]
    %v27 = vld [vmem:[%s1 + $0x28] sm:$0xff]
    %v28 = vld [vmem:[%s1 + $0x30] sm:$0xff]
    %v29 = vld [vmem:[%s1 + $0x38] sm:$0xff]
    %v30 = vld [vmem:[%s1 + $0x40] sm:$0xff]
    %v31 = vld [vmem:[%s1 + $0x48] sm:$0xff]
    %v32 = vld [vmem:[%s1 + $0x50] sm:$0xff]
    %v33 = vld [vmem:[%s1 + $0x58] sm:$0xff]
    %v34 = vld [vmem:[%s1 + $0x60] sm:$0xff]
    %v35 = vld [vmem:[%s1 + $0x68] sm:$0xff]
    %v36 = vld [vmem:[%s1 + $0x70] sm:$0xff]
    %v37 = vld [vmem:[%s1 + $0x78] sm:$0xff]
    %v38 = vld [vmem:[%s2] sm:$0x1]
    %v40 = vlaneseq
    %v41 = vshrl.u32 %v40, 7
    %v42 = vsub.s32 0, %v41
    %v43 = vrot.slane %v38, %v42
    %45 = vmatprep.subr.mxu0 0.0
    %46 = vmatpush1.msra.mxu0 %v37
    %47 = vmatprep.subr.mxu0 0.0
    %48 = vmatpush1.msra.mxu0 %v36
    %49 = vmatprep.subr.mxu0 0.0
    %50 = vmatpush1.msra.mxu0 %v35
    %51 = vmatprep.subr.mxu0 0.0
    %52 = vmatpush1.msra.mxu0 %v34
    %53 = vmatprep.subr.mxu0 0.0
    %54 = vmatpush1.msra.mxu0 %v33
    %55 = vmatprep.subr.mxu0 0.0
    %56 = vmatpush1.msra.mxu0 %v32
    %57 = vmatprep.subr.mxu0 0.0
    %58 = vmatpush1.msra.mxu0 %v31
    %59 = vmatprep.subr.mxu0 0.0
    %60 = vmatpush1.msra.mxu0 %v30
    %61 = vmatprep.subr.mxu0 0.0
    %62 = vmatpush1.msra.mxu0 %v29
    %63 = vmatprep.subr.mxu0 0.0
    %64 = vmatpush1.msra.mxu0 %v28
    %65 = vmatprep.subr.mxu0 0.0
    %66 = vmatpush1.msra.mxu0 %v27
    %67 = vmatprep.subr.mxu0 0.0
    %68 = vmatpush1.msra.mxu0 %v26
    %69 = vmatprep.subr.mxu0 0.0
    %70 = vmatpush1.msra.mxu0 %v25
    %71 = vmatprep.subr.mxu0 0.0
    %72 = vmatpush1.msra.mxu0 %v24
    %73 = vmatprep.subr.mxu0 0.0
    %74 = vmatpush1.msra.mxu0 %v23
    %75 = vmatprep.subr.mxu0 0.0
    %76 = vmatpush1.msra.mxu0 %v22
    %77 = vmatprep.subr.mxu0 0.0
    %78 = vmatpush2.msra.mxu0 0.0
    %79 = vmatprep.subr.mxu0 0.0
    %80 = vmatpush2.msra.mxu0 0.0
    %81 = vmatprep.subr.mxu0 0.0
    %82 = vmatpush2.msra.mxu0 0.0
    %83 = vmatprep.subr.mxu0 0.0
    %84 = vmatpush2.msra.mxu0 0.0
    %85 = vmatprep.subr.mxu0 0.0
    %86 = vmatpush2.msra.mxu0 0.0
    %87 = vmatprep.subr.mxu0 0.0
    %88 = vmatpush2.msra.mxu0 0.0
    %89 = vmatprep.subr.mxu0 0.0
    %90 = vmatpush2.msra.mxu0 0.0
    %91 = vmatprep.subr.mxu0 0.0
    %92 = vmatpush2.msra.mxu0 0.0
    %93 = vmatprep.subr.mxu0 0.0
    %94 = vmatpush2.msra.mxu0 0.0
    %95 = vmatprep.subr.mxu0 0.0
    %96 = vmatpush2.msra.mxu0 0.0
    %97 = vmatprep.subr.mxu0 0.0
    %98 = vmatpush2.msra.mxu0 0.0
    %99 = vmatprep.subr.mxu0 0.0
    %100 = vmatpush2.msra.mxu0 0.0
    %101 = vmatprep.subr.mxu0 0.0
    %102 = vmatpush2.msra.mxu0 0.0
    %103 = vmatprep.subr.mxu0 0.0
    %104 = vmatpush2.msra.mxu0 0.0
    %105 = vmatprep.subr.mxu0 0.0
    %106 = vmatpush2.msra.mxu0 0.0
    %107 = vmatprep.subr.mxu0 0.0
    %108 = vmatpush2.msra.mxu0 0.0
    %109 = vmatprep.mubr.f32.mxu0 0.0
    %110 = vmatmul.mubr.f32.gmra.mxu0 %v21
    %v111 = vpop.f32.mrf.mxu0
    %v112 = vadd.f32 %v43, %v111
    %v113 = vpop.f32.mrf.mxu0
    %114 = vdwg.mxu0
    %v115 = vxor.u32 %v112, 2147483648
    %v116 = vmul.f32 %v115, 1.442695
    %v117 = vpow.pop %v116
    %v118 = vadd.f32 %v117, 1.0
    %v119 = vrcp.pop %v118
    %v120 = vmul.f32 1.0, %v119
    %v121 = vmul.f32 %v112, %v120
    %v122 = vld [vmem:[%s3] sm:$0xff]
    %v123 = vld [vmem:[%s3 + $0x8] sm:$0xff]
    %v124 = vld [vmem:[%s3 + $0x10] sm:$0xff]
    %v125 = vld [vmem:[%s3 + $0x18] sm:$0xff]
    %v126 = vld [vmem:[%s3 + $0x20] sm:$0xff]
    %v127 = vld [vmem:[%s3 + $0x28] sm:$0xff]
    %v128 = vld [vmem:[%s3 + $0x30] sm:$0xff]
    %v129 = vld [vmem:[%s3 + $0x38] sm:$0xff]
    %v130 = vld [vmem:[%s3 + $0x40] sm:$0xff]
    %v131 = vld [vmem:[%s3 + $0x48] sm:$0xff]
    %v132 = vld [vmem:[%s3 + $0x50] sm:$0xff]
    %v133 = vld [vmem:[%s3 + $0x58] sm:$0xff]
    %v134 = vld [vmem:[%s3 + $0x60] sm:$0xff]
    %v135 = vld [vmem:[%s3 + $0x68] sm:$0xff]
    %v136 = vld [vmem:[%s3 + $0x70] sm:$0xff]
    %v137 = vld [vmem:[%s3 + $0x78] sm:$0xff]
    %v138 = vld [vmem:[%s4] sm:$0x1]
    %v140 = vlaneseq
    %v141 = vshrl.u32 %v140, 7
    %v142 = vsub.s32 0, %v141
    %v143 = vrot.slane %v138, %v142
    %145 = vmatprep.subr.mxu0 0.0
    %146 = vmatpush1.msra.mxu0 %v137
    %147 = vmatprep.subr.mxu0 0.0
    %148 = vmatpush1.msra.mxu0 %v136
    %149 = vmatprep.subr.mxu0 0.0
    %150 = vmatpush1.msra.mxu0 %v135
    %151 = vmatprep.subr.mxu0 0.0
    %152 = vmatpush1.msra.mxu0 %v134
    %153 = vmatprep.subr.mxu0 0.0
    %154 = vmatpush1.msra.mxu0 %v133
    %155 = vmatprep.subr.mxu0 0.0
    %156 = vmatpush1.msra.mxu0 %v132
    %157 = vmatprep.subr.mxu0 0.0
    %158 = vmatpush1.msra.mxu0 %v131
    %159 = vmatprep.subr.mxu0 0.0
    %160 = vmatpush1.msra.mxu0 %v130
    %161 = vmatprep.subr.mxu0 0.0
    %162 = vmatpush1.msra.mxu0 %v129
    %163 = vmatprep.subr.mxu0 0.0
    %164 = vmatpush1.msra.mxu0 %v128
    %165 = vmatprep.subr.mxu0 0.0
    %166 = vmatpush1.msra.mxu0 %v127
    %167 = vmatprep.subr.mxu0 0.0
    %168 = vmatpush1.msra.mxu0 %v126
    %169 = vmatprep.subr.mxu0 0.0
    %170 = vmatpush1.msra.mxu0 %v125
    %171 = vmatprep.subr.mxu0 0.0
    %172 = vmatpush1.msra.mxu0 %v124
    %173 = vmatprep.subr.mxu0 0.0
    %174 = vmatpush1.msra.mxu0 %v123
    %175 = vmatprep.subr.mxu0 0.0
    %176 = vmatpush1.msra.mxu0 %v122
    %177 = vmatprep.subr.mxu0 0.0
    %178 = vmatpush2.msra.mxu0 0.0
    %179 = vmatprep.subr.mxu0 0.0
    %180 = vmatpush2.msra.mxu0 0.0
    %181 = vmatprep.subr.mxu0 0.0
    %182 = vmatpush2.msra.mxu0 0.0
    %183 = vmatprep.subr.mxu0 0.0
    %184 = vmatpush2.msra.mxu0 0.0
    %185 = vmatprep.subr.mxu0 0.0
    %186 = vmatpush2.msra.mxu0 0.0
    %187 = vmatprep.subr.mxu0 0.0
    %188 = vmatpush2.msra.mxu0 0.0
    %189 = vmatprep.subr.mxu0 0.0
    %190 = vmatpush2.msra.mxu0 0.0
    %191 = vmatprep.subr.mxu0 0.0
    %192 = vmatpush2.msra.mxu0 0.0
    %193 = vmatprep.subr.mxu0 0.0
    %194 = vmatpush2.msra.mxu0 0.0
    %195 = vmatprep.subr.mxu0 0.0
    %196 = vmatpush2.msra.mxu0 0.0
    %197 = vmatprep.subr.mxu0 0.0
    %198 = vmatpush2.msra.mxu0 0.0
    %199 = vmatprep.subr.mxu0 0.0
    %200 = vmatpush2.msra.mxu0 0.0
    %201 = vmatprep.subr.mxu0 0.0
    %202 = vmatpush2.msra.mxu0 0.0
    %203 = vmatprep.subr.mxu0 0.0
    %204 = vmatpush2.msra.mxu0 0.0
    %205 = vmatprep.subr.mxu0 0.0
    %206 = vmatpush2.msra.mxu0 0.0
    %207 = vmatprep.subr.mxu0 0.0
    %208 = vmatpush2.msra.mxu0 0.0
    %209 = vmatprep.mubr.f32.mxu0 0.0
    %210 = vmatmul.mubr.f32.gmra.mxu0 %v121
    %v211 = vpop.f32.mrf.mxu0
    %v212 = vadd.f32 %v143, %v211
    %v213 = vpop.f32.mrf.mxu0
    %214 = vdwg.mxu0
    %215 = vst [vmem:[#allocation2] sm:$0xff] %v212
    // Predicated region
    $region22: #{time_embedding_forward.1} parent=1 // pred_check
      _
    $region23: #{time_embedding_forward.1} parent=1 // pred_check_branch
      %217 = sbr.rel (0) target = $region25
    $region24: #{time_embedding_forward.1} parent=1 // pred_region
      %s219 = ssub.s32 128, 128
      %220 = vsyncadd [#allocation3], %s219
      %s222 = sshll.u32 [#allocation2], 4
      %s223 = int_to_ptr.vmem [resolvable:$true] %s222
      %225 = dma.vmem_to_hbm [thread:$0]  %s223, 128, %s5, [#allocation3]
    $region25: #{time_embedding_forward.1} parent=1 // pred_fallthru
      _
    // Predicated region
    $region26: #{time_embedding_forward.1} parent=1 // pred_check
      _
    $region27: #{time_embedding_forward.1} parent=1 // pred_check_branch
      %227 = sbr.rel (0) target = $region29
    $region28: #{time_embedding_forward.1} parent=1 // pred_region
      %228 = dma.done [#allocation3], 128
    $region29: #{time_embedding_forward.1} parent=1 // pred_fallthru
      _
    %229 = vsyncpa [#allocation3], 1

</llo_original>
